<compile_context>
chip_gen: v6e
topology: v6e:2x2x1
jax: 0.10.0
libtpu: 0.0.40
codegen_flags: <defaults>
</compile_context>

<pallas_src>
import functools

import jax
import jax.numpy as jnp
from jax import lax
from jax.experimental import pallas as pl
from jax.experimental.pallas import tpu as pltpu


def _round_up(x, m):
    return (x + m - 1) // m * m


def _padded_block_bytes(shape, dtype):
    """VMEM footprint of one block with the last two dims rounded to the
    native (sublane, 128) tile for the dtype."""
    itemsize = jnp.dtype(dtype).itemsize
    sublane = {4: 8, 2: 16, 1: 32}.get(itemsize, 8)
    dims = list(shape)
    if len(dims) >= 1:
        dims[-1] = _round_up(dims[-1], 128)
    if len(dims) >= 2:
        dims[-2] = _round_up(dims[-2], sublane)
    n = itemsize
    for d in dims:
        n *= d
    return n


def _fused_conv_bn_kernel(x_ref, w_ref, b_ref, o_ref, rhs_ref, *,
                          kk_offsets, cin_g, m_pad):
    """One (batch, group) grid step.

    x_ref:   (1, 1, Cin_g, L)        bf16 flattened padded plane
    w_ref:   (1, Cout_g, K*K*Cin_g)  bf16, BN scale pre-folded
    b_ref:   (1, Cout_g, 1)          f32 folded BN bias
    o_ref:   (1, 1, Cout_g, M_pad)   output (NCHW-ordered, lane-dense)
    rhs_ref: (K*K*Cin_g, M_pad)      bf16 VMEM scratch (stacked taps)
    """
    xv = x_ref[0, 0]                                      # (Cin_g, L) bf16
    # Stack the K*K shifted lane-slices along the contraction (sublane) dim.
    # Offsets are static -> fully unrolled at trace time.
    for idx, off in enumerate(kk_offsets):
        rhs_ref[idx * cin_g:(idx + 1) * cin_g, :] = xv[:, off:off + m_pad]
    # One fat MXU contraction over K*K*Cin_g, accumulated in f32.
    acc = jnp.dot(w_ref[0], rhs_ref[...],
                  preferred_element_type=jnp.float32)     # (Cout_g, M_pad)
    # Fused inference-BN epilogue: scale already folded into the weights, so
    # only the per-channel bias add remains.
    o_ref[0, 0] = (acc + b_ref[0]).astype(o_ref.dtype)


def linear_conv_forward(x, weight, gamma, beta, running_mean, running_var,
                        *, stride=1, groups=1, eps=1e-4,
                        compute_dtype=jnp.bfloat16, out_dtype=jnp.float32):
    """LinearConv forward.  x: [N, Cin, H, W] (NCHW) -> [N, Cout, Ho, Wo]."""
    N, Cin, H, W = x.shape
    Cout, Cin_g, K, _ = weight.shape
    assert Cin == Cin_g * groups and Cout % groups == 0
    cout_g = Cout // groups
    KK = K * K
    KKC = KK * Cin_g
    pad = K // 2                       # 'same' padding (odd K, as in the module)
    Hp, Wp = H + 2 * pad, W + 2 * pad
    Hd = Hp - K + 1                    # dense (stride-1) output rows
    Ho = (H + 2 * pad - K) // stride + 1
    Wo = (W + 2 * pad - K) // stride + 1
    M = Hd * Wp                        # flattened dense output length
    M_pad = _round_up(M, 128)          # lane-dense output (unmasked stores)
    max_off = (K - 1) * Wp + (K - 1)
    # Enough trailing zero rows that every shifted window [off, off+M_pad) is
    # in bounds (extra lanes are cropped in the wrapper).
    need = max_off + M_pad
    extra_rows = max(0, -(-(need - Hp * Wp) // Wp))
    L = (Hp + extra_rows) * Wp

    # Fold BN (inference) into the f32 master weights + a per-channel bias,
    # *before* the bf16 cast (avoids double rounding).
    scale = (gamma / jnp.sqrt(running_var + eps)).astype(jnp.float32)
    bias = (beta - running_mean * scale).astype(jnp.float32)
    w_eff = weight.astype(jnp.float32) * scale[:, None, None, None]

    # Stay in NCHW: one spatial pad (cast to bf16 at the same time), flatten
    # H*W, split the group axis.
    xp = jnp.pad(x.astype(compute_dtype),
                 ((0, 0), (0, 0), (pad, pad + extra_rows), (pad, pad)))
    x_flat = xp.reshape(N, groups, Cin_g, L)

    # Weight as (groups, Cout_g, K*K*Cin_g) with column = (dy*K+dx)*Cin_g + c,
    # matching the kernel's stacked-RHS row order.
    w = w_eff.reshape(groups, cout_g, Cin_g, K, K)
    w = jnp.transpose(w, (0, 1, 3, 4, 2)).reshape(groups, cout_g, KKC)
    w = w.astype(compute_dtype)

    b = bias.reshape(groups, cout_g, 1)

    kk_offsets = tuple(dy * Wp + dx for dy in range(K) for dx in range(K))
    kernel = functools.partial(_fused_conv_bn_kernel,
                               kk_offsets=kk_offsets, cin_g=Cin_g, m_pad=M_pad)

    # VMEM budget from the actual blocks (double-buffered inputs/outputs +
    # scratch), clamped so the same limit is also safe on v7x (64 MiB VMEM).
    block_bytes = (
        2 * _padded_block_bytes((1, 1, Cin_g, L), compute_dtype)
        + 2 * _padded_block_bytes((1, cout_g, KKC), compute_dtype)
        + 2 * _padded_block_bytes((1, cout_g, 1), jnp.float32)
        + 2 * _padded_block_bytes((1, 1, cout_g, M_pad), out_dtype)
        + _padded_block_bytes((KKC, M_pad), compute_dtype))
    vmem_limit = int(min(max(block_bytes + (1 << 20), 4 << 20), 48 << 20))

    flops = 2 * N * groups * cout_g * KKC * M_pad
    bytes_accessed = (x_flat.size * x_flat.dtype.itemsize
                      + w.size * w.dtype.itemsize + b.size * 4
                      + N * groups * cout_g * M_pad
                      * jnp.dtype(out_dtype).itemsize)

    out = pl.pallas_call(
        kernel,
        out_shape=jax.ShapeDtypeStruct((N, groups, cout_g, M_pad), out_dtype),
        grid_spec=pltpu.PrefetchScalarGridSpec(
            num_scalar_prefetch=0,
            grid=(N, groups),
            in_specs=[
                pl.BlockSpec((1, 1, Cin_g, L), lambda n, g: (n, g, 0, 0)),
                pl.BlockSpec((1, cout_g, KKC), lambda n, g: (g, 0, 0)),
                pl.BlockSpec((1, cout_g, 1), lambda n, g: (g, 0, 0)),
            ],
            out_specs=pl.BlockSpec((1, 1, cout_g, M_pad),
                                   lambda n, g: (n, g, 0, 0)),
            scratch_shapes=[pltpu.VMEM((KKC, M_pad), compute_dtype)],
        ),
        compiler_params=pltpu.CompilerParams(
            dimension_semantics=("parallel", "parallel"),
            vmem_limit_bytes=vmem_limit,
        ),
        cost_estimate=pl.CostEstimate(flops=flops, transcendentals=0,
                                      bytes_accessed=bytes_accessed),
    )(x_flat, w, b)

    # (N, groups, Cout_g, M_pad) is already NCHW-ordered: drop the lane pad,
    # free-reshape to (N, Cout, Hd, Wp), then stride/crop (small copy, no
    # transpose passes).
    out = out.reshape(N, Cout, M_pad)[:, :, :M].reshape(N, Cout, Hd, Wp)
    out = out[:, :, ::stride, ::stride][:, :, :Ho, :Wo]
    return out


def _reference_conv_bias(x, w, bias, *, stride, groups):
    pad = w.shape[-1] // 2
    y = lax.conv_general_dilated(
        x, w, (stride, stride), ((pad, pad), (pad, pad)),
        dimension_numbers=("NCHW", "OIHW", "NCHW"),
        feature_group_count=groups,
        precision=lax.Precision.HIGHEST)
    return y + bias[None, :, None, None]


if __name__ == "__main__":
    # LinearConv(in_channels=4, out_channels=8, kernel_size=3, stride=1, groups=1)
    in_channels, out_channels, kernel_size, stride, groups = 4, 8, 3, 1, 1
    eps = 1e-4   # matches nn.BatchNorm2d(..., eps=0.0001) in the module

    key = jax.random.PRNGKey(0)
    k_x, k_w, k_g, k_b, k_m, k_v = jax.random.split(key, 6)

    x = jax.random.normal(k_x, (2, in_channels, 16, 16), dtype=jnp.float32)
    weight = jax.random.normal(
        k_w, (out_channels, in_channels // groups, kernel_size, kernel_size),
        dtype=jnp.float32) * 0.1
    gamma = jax.random.uniform(k_g, (out_channels,), minval=0.5, maxval=1.5)
    beta = jax.random.normal(k_b, (out_channels,)) * 0.1
    running_mean = jax.random.normal(k_m, (out_channels,)) * 0.1
    running_var = jax.random.uniform(k_v, (out_channels,), minval=0.5,
                                     maxval=1.5)

    fwd = jax.jit(functools.partial(linear_conv_forward,
                                    stride=stride, groups=groups, eps=eps))
    out = jax.block_until_ready(fwd(x, weight, gamma, beta,
                                    running_mean, running_var))

    # Tight check: reference fed the same bf16-rounded, BN-scale-folded
    # operands -> isolates kernel correctness (accumulation-order noise only).
    scale = gamma / jnp.sqrt(running_var + eps)
    bias = beta - running_mean * scale
    w_eff_q = ((weight * scale[:, None, None, None])
               .astype(jnp.bfloat16).astype(jnp.float32))
    xq = x.astype(jnp.bfloat16).astype(jnp.float32)
    ref = _reference_conv_bias(xq, w_eff_q, bias, stride=stride, groups=groups)

    assert out.shape == ref.shape == (2, out_channels, 16, 16), out.shape
    assert jnp.allclose(out, ref, atol=1e-3, rtol=1e-3), float(
        jnp.max(jnp.abs(out - ref)))

    # Loose sanity check against the full-precision Conv+BN semantics
    # (catches semantic errors; slack covers the bf16 operand rounding).
    ref_full = _reference_conv_bias(
        x, weight * scale[:, None, None, None], bias,
        stride=stride, groups=groups)
    assert jnp.allclose(out, ref_full, atol=1e-1, rtol=0.0), float(
        jnp.max(jnp.abs(out - ref_full)))

    print("KERNEL_OK")
</pallas_src>

<mosaic_0001>
module attributes {stable_mosaic.version = 11 : i64} {
  func.func @_fused_conv_bn_kernel(%arg0: i32, %arg1: i32, %arg2: memref<1x1x4x432xbf16, #tpu.memory_space<vmem>>, %arg3: memref<1x8x36xbf16, #tpu.memory_space<vmem>>, %arg4: memref<1x8x1xf32, #tpu.memory_space<vmem>>, %arg5: memref<1x1x8x384xf32, #tpu.memory_space<vmem>>, %arg6: memref<36x384xbf16, #tpu.memory_space<vmem>>) attributes {dimension_semantics = [#tpu.dimension_semantics<parallel>, #tpu.dimension_semantics<parallel>], iteration_bounds = array<i64: 2, 1>, scalar_prefetch = 0 : i64, scratch_operands = 1 : i64, tpu.core_type = #tpu.core_type<tc>, window_params = [{transform_indices = @transform_0, window_bounds = array<i64: 1, 1, 4, 432>}, {transform_indices = @transform_1, window_bounds = array<i64: 1, 8, 36>}, {transform_indices = @transform_2, window_bounds = array<i64: 1, 8, 1>}, {transform_indices = @transform_3, window_bounds = array<i64: 1, 1, 8, 384>}]} {
    %c0 = arith.constant 0 : index
    %c0_0 = arith.constant 0 : index
    %c0_1 = arith.constant 0 : index
    %c0_2 = arith.constant 0 : index
    %0 = vector.load %arg2[%c0, %c0_0, %c0_1, %c0_2] : memref<1x1x4x432xbf16, #tpu.memory_space<vmem>>, vector<1x1x4x432xbf16>
    %1 = vector.shape_cast %0 : vector<1x1x4x432xbf16> to vector<4x432xbf16>
    %2 = vector.extract_strided_slice %1 {offsets = [0, 0], sizes = [4, 384], strides = [1, 1]} : vector<4x432xbf16> to vector<4x384xbf16>
    %c0_3 = arith.constant 0 : index
    %c0_4 = arith.constant 0 : index
    %3 = vector.load %arg6[%c0_3, %c0_4] : memref<36x384xbf16, #tpu.memory_space<vmem>>, vector<4x384xbf16>
    tpu.vector_store %arg6[%c0_3, %c0_4], %2 {strides = array<i32>} : memref<36x384xbf16, #tpu.memory_space<vmem>>, vector<4x384xbf16>,
    %4 = vector.extract_strided_slice %1 {offsets = [0, 1], sizes = [4, 384], strides = [1, 1]} : vector<4x432xbf16> to vector<4x384xbf16>
    %c4 = arith.constant 4 : index
    %c0_5 = arith.constant 0 : index
    %5 = vector.load %arg6[%c4, %c0_5] : memref<36x384xbf16, #tpu.memory_space<vmem>>, vector<4x384xbf16>
    tpu.vector_store %arg6[%c4, %c0_5], %4 {strides = array<i32>} : memref<36x384xbf16, #tpu.memory_space<vmem>>, vector<4x384xbf16>,
    %6 = vector.extract_strided_slice %1 {offsets = [0, 2], sizes = [4, 384], strides = [1, 1]} : vector<4x432xbf16> to vector<4x384xbf16>
    %c8 = arith.constant 8 : index
    %c0_6 = arith.constant 0 : index
    %7 = vector.load %arg6[%c8, %c0_6] : memref<36x384xbf16, #tpu.memory_space<vmem>>, vector<4x384xbf16>
    tpu.vector_store %arg6[%c8, %c0_6], %6 {strides = array<i32>} : memref<36x384xbf16, #tpu.memory_space<vmem>>, vector<4x384xbf16>,
    %8 = vector.extract_strided_slice %1 {offsets = [0, 18], sizes = [4, 384], strides = [1, 1]} : vector<4x432xbf16> to vector<4x384xbf16>
    %c12 = arith.constant 12 : index
    %c0_7 = arith.constant 0 : index
    %9 = vector.load %arg6[%c12, %c0_7] : memref<36x384xbf16, #tpu.memory_space<vmem>>, vector<4x384xbf16>
    tpu.vector_store %arg6[%c12, %c0_7], %8 {strides = array<i32>} : memref<36x384xbf16, #tpu.memory_space<vmem>>, vector<4x384xbf16>,
    %10 = vector.extract_strided_slice %1 {offsets = [0, 19], sizes = [4, 384], strides = [1, 1]} : vector<4x432xbf16> to vector<4x384xbf16>
    %c16 = arith.constant 16 : index
    %c0_8 = arith.constant 0 : index
    %11 = vector.load %arg6[%c16, %c0_8] : memref<36x384xbf16, #tpu.memory_space<vmem>>, vector<4x384xbf16>
    tpu.vector_store %arg6[%c16, %c0_8], %10 {strides = array<i32>} : memref<36x384xbf16, #tpu.memory_space<vmem>>, vector<4x384xbf16>,
    %12 = vector.extract_strided_slice %1 {offsets = [0, 20], sizes = [4, 384], strides = [1, 1]} : vector<4x432xbf16> to vector<4x384xbf16>
    %c20 = arith.constant 20 : index
    %c0_9 = arith.constant 0 : index
    %13 = vector.load %arg6[%c20, %c0_9] : memref<36x384xbf16, #tpu.memory_space<vmem>>, vector<4x384xbf16>
    tpu.vector_store %arg6[%c20, %c0_9], %12 {strides = array<i32>} : memref<36x384xbf16, #tpu.memory_space<vmem>>, vector<4x384xbf16>,
    %14 = vector.extract_strided_slice %1 {offsets = [0, 36], sizes = [4, 384], strides = [1, 1]} : vector<4x432xbf16> to vector<4x384xbf16>
    %c24 = arith.constant 24 : index
    %c0_10 = arith.constant 0 : index
    %15 = vector.load %arg6[%c24, %c0_10] : memref<36x384xbf16, #tpu.memory_space<vmem>>, vector<4x384xbf16>
    tpu.vector_store %arg6[%c24, %c0_10], %14 {strides = array<i32>} : memref<36x384xbf16, #tpu.memory_space<vmem>>, vector<4x384xbf16>,
    %16 = vector.extract_strided_slice %1 {offsets = [0, 37], sizes = [4, 384], strides = [1, 1]} : vector<4x432xbf16> to vector<4x384xbf16>
    %c28 = arith.constant 28 : index
    %c0_11 = arith.constant 0 : index
    %17 = vector.load %arg6[%c28, %c0_11] : memref<36x384xbf16, #tpu.memory_space<vmem>>, vector<4x384xbf16>
    tpu.vector_store %arg6[%c28, %c0_11], %16 {strides = array<i32>} : memref<36x384xbf16, #tpu.memory_space<vmem>>, vector<4x384xbf16>,
    %18 = vector.extract_strided_slice %1 {offsets = [0, 38], sizes = [4, 384], strides = [1, 1]} : vector<4x432xbf16> to vector<4x384xbf16>
    %c32 = arith.constant 32 : index
    %c0_12 = arith.constant 0 : index
    %19 = vector.load %arg6[%c32, %c0_12] : memref<36x384xbf16, #tpu.memory_space<vmem>>, vector<4x384xbf16>
    tpu.vector_store %arg6[%c32, %c0_12], %18 {strides = array<i32>} : memref<36x384xbf16, #tpu.memory_space<vmem>>, vector<4x384xbf16>,
    %c0_13 = arith.constant 0 : index
    %c0_14 = arith.constant 0 : index
    %c0_15 = arith.constant 0 : index
    %20 = vector.load %arg3[%c0_13, %c0_14, %c0_15] : memref<1x8x36xbf16, #tpu.memory_space<vmem>>, vector<1x8x36xbf16>
    %21 = vector.shape_cast %20 : vector<1x8x36xbf16> to vector<8x36xbf16>
    %c0_16 = arith.constant 0 : index
    %c0_17 = arith.constant 0 : index
    %22 = vector.load %arg6[%c0_16, %c0_17] : memref<36x384xbf16, #tpu.memory_space<vmem>>, vector<36x384xbf16>
    %cst = arith.constant dense<0.000000e+00> : vector<8x384xf32>
    %23 = tpu.matmul %21, %22, %cst {dimension_numbers = #tpu.dot_dimension_numbers<[1], [0], [0], [1], [0, 0, 1, 1], [], []>} : vector<8x36xbf16>, vector<36x384xbf16>, vector<8x384xf32> -> vector<8x384xf32>
    %c0_18 = arith.constant 0 : index
    %c0_19 = arith.constant 0 : index
    %c0_20 = arith.constant 0 : index
    %24 = vector.load %arg4[%c0_18, %c0_19, %c0_20] : memref<1x8x1xf32, #tpu.memory_space<vmem>>, vector<1x8x1xf32>
    %25 = vector.shape_cast %24 : vector<1x8x1xf32> to vector<8x1xf32>
    %26 = vector.broadcast %25 : vector<8x1xf32> to vector<8x384xf32>
    %27 = arith.addf %23, %26 : vector<8x384xf32>
    %c0_21 = arith.constant 0 : index
    %c0_22 = arith.constant 0 : index
    %c0_23 = arith.constant 0 : index
    %c0_24 = arith.constant 0 : index
    %28 = vector.load %arg5[%c0_21, %c0_22, %c0_23, %c0_24] : memref<1x1x8x384xf32, #tpu.memory_space<vmem>>, vector<1x1x8x384xf32>
    %29 = vector.shape_cast %28 : vector<1x1x8x384xf32> to vector<8x384xf32>
    %30 = vector.shape_cast %27 : vector<8x384xf32> to vector<1x1x8x384xf32>
    tpu.vector_store %arg5[%c0_21, %c0_22, %c0_23, %c0_24], %30 {strides = array<i32>} : memref<1x1x8x384xf32, #tpu.memory_space<vmem>>, vector<1x1x8x384xf32>,
    return
  }
  func.func @transform_0(%arg0: i32, %arg1: i32) -> (i32, i32, i32, i32) {
    %c0_i32 = arith.constant 0 : i32
    %c0_i32_0 = arith.constant 0 : i32
    %c0_i32_1 = arith.constant 0 : i32
    return %arg0, %arg1, %c0_i32, %c0_i32_0 : i32, i32, i32, i32
  }
  func.func @transform_1(%arg0: i32, %arg1: i32) -> (i32, i32, i32) {
    %c0_i32 = arith.constant 0 : i32
    %c0_i32_0 = arith.constant 0 : i32
    %c0_i32_1 = arith.constant 0 : i32
    return %arg1, %c0_i32, %c0_i32_0 : i32, i32, i32
  }
  func.func @transform_2(%arg0: i32, %arg1: i32) -> (i32, i32, i32) {
    %c0_i32 = arith.constant 0 : i32
    %c0_i32_0 = arith.constant 0 : i32
    %c0_i32_1 = arith.constant 0 : i32
    return %arg1, %c0_i32, %c0_i32_0 : i32, i32, i32
  }
  func.func @transform_3(%arg0: i32, %arg1: i32) -> (i32, i32, i32, i32) {
    %c0_i32 = arith.constant 0 : i32
    %c0_i32_0 = arith.constant 0 : i32
    %c0_i32_1 = arith.constant 0 : i32
    return %arg0, %arg1, %c0_i32, %c0_i32_0 : i32, i32, i32, i32
  }
}

</mosaic_0001>

<llo_original>
// kernel: linear_conv_forward.1
$region0: #{linear_conv_forward.1}
  #allocation0 [shape = 'u32[]', space=smem, size = 0x4, offset = 0x4, fixed_abs, tag = 'smem constant byte address 0x4 - core index']
  #allocation1 [shape = 'u32[144,128]{1,0:T(1,128)}', space=vmem, size = 0x12000, scoped, tag = 'internal scratch']
  #allocation2 [shape = 'bf16[36,384]{1,0:T(8,128)(2,1)}', space=vmem, size = 0x7800, scoped, tag = 'scratch operand']
  %s0 = inlined_call_operand.vmem [shape: bf16[2,1,4,432], index: 0, kind: input, shape index: {}]
  %s1 = inlined_call_operand.vmem [shape: bf16[1,8,36], index: 1, kind: input, shape index: {}]
  %s2 = inlined_call_operand.vmem [shape: f32[1,8,1], index: 2, kind: input, shape index: {}]
  %s3 = inlined_call_operand.vmem [shape: f32[2,1,8,384], index: 3, kind: output, shape index: {}]
  %s4 = sld [smem:[#allocation0]]
  $region45: #{linear_conv_forward.1} parent=0
    _
  %s6 = ssub.s32 1, %s4
  %s7 = scalar_select 0, %s6, %s4
  loop: start=0, step=1, limit=4
  $region2: #{linear_conv_forward.1} parent=0 // loop_pre_header
    _
  $region3: #{linear_conv_forward.1} parent=0 // loop_header
    %s9 = sphi 0, %s13
    %p10 = scmp.ge.s32.totalorder %s9, 4
    %s16 = sphi 0, %s28
    %s17 = sphi 0, %s24
    %s18 = sphi 0, %s16
    %s19 = sphi 0, %s17
    %s20 = sphi 0, %s18
    %s21 = sphi 0, %s19
    %s33 = sphi 0, %s35
    %s36 = sphi 0, %s33
    %s37 = sphi 0, %s36
    %s53 = sphi 0, %s37
    %s59 = sphi 0, %s61
    %s62 = sphi 0, %s59
    %s63 = sphi 0, %s62
    %s79 = sphi 0, %s63
    %s85 = sphi 0, %s87
    %s88 = sphi 0, %s85
    %s89 = sphi 0, %s88
    %s105 = sphi 0, %s89
    %s113 = sphi 0, %s115
    %s116 = sphi 0, %s113
    %s117 = sphi 0, %s116
    %s133 = sphi 0, %s117
  $region4: #{linear_conv_forward.1} parent=0 // loop_header_branch
    %12 = sbr.rel (%p10) target = $region8
  $region5: #{linear_conv_forward.1} parent=0 // loop_body
    %s14 = ssub.s32 %s9, 1
    %s15 = ssub.s32 %s9, 2
    %s22 = sadd.s32 1, %s17
    %p23 = scmp.ge.s32.totalorder %s22, 1
    %s24 = scalar_select %p23, 0, %s22
    %s25 = sadd.s32 1, %s16
    %s26 = scalar_select %p23, %s25, %s16
    %p27 = scmp.ge.s32.totalorder %s26, 2
    %s28 = scalar_select %p27, 0, %s26
    %s29 = ssub.s32 %s16, %s28
    %s30 = ssub.s32 %s17, %s24
    %s31 = sor.u32 %s29, %s30
    %p32 = scmp.eq.s32.totalorder %s31, 0
    %s34 = sadd.s32 %s33, 1
    %s35 = scalar_select %p32, %s33, %s34
    %p38 = pneg %p32
    %p39 = scmp.eq.s32.totalorder %s9, 1
    %p40 = por %p38, %p39
    %p41 = scmp.ne.s32.totalorder %s33, %s36
    %p42 = scmp.eq.s32.totalorder %s9, 0
    %p43 = por %p41, %p42
    %p44 = scmp.ne.s32.totalorder %s33, %s36
    %p45 = scmp.eq.s32.totalorder %s14, 1
    %p46 = por %p44, %p45
    %p47 = scmp.ne.s32.totalorder %s36, %s37
    %p48 = scmp.eq.s32.totalorder %s14, 0
    %p49 = por %p47, %p48
    %p50 = scmp.ne.s32.totalorder %s36, %s37
    %p51 = scmp.eq.s32.totalorder %s15, 1
    %p52 = por %p50, %p51
    %p54 = scmp.ne.s32.totalorder %s37, %s53
    %p55 = scmp.eq.s32.totalorder %s15, 0
    %p56 = por %p54, %p55
    %s57 = ssub.s32 %s17, %s24
    %p58 = scmp.eq.s32.totalorder %s57, 0
    %s60 = sadd.s32 %s59, 1
    %s61 = scalar_select %p58, %s59, %s60
    %p64 = pneg %p58
    %p65 = scmp.eq.s32.totalorder %s9, 1
    %p66 = por %p64, %p65
    %p67 = scmp.ne.s32.totalorder %s59, %s62
    %p68 = scmp.eq.s32.totalorder %s9, 0
    %p69 = por %p67, %p68
    %p70 = scmp.ne.s32.totalorder %s59, %s62
    %p71 = scmp.eq.s32.totalorder %s14, 1
    %p72 = por %p70, %p71
    %p73 = scmp.ne.s32.totalorder %s62, %s63
    %p74 = scmp.eq.s32.totalorder %s14, 0
    %p75 = por %p73, %p74
    %p76 = scmp.ne.s32.totalorder %s62, %s63
    %p77 = scmp.eq.s32.totalorder %s15, 1
    %p78 = por %p76, %p77
    %p80 = scmp.ne.s32.totalorder %s63, %s79
    %p81 = scmp.eq.s32.totalorder %s15, 0
    %p82 = por %p80, %p81
    %s83 = ssub.s32 %s17, %s24
    %p84 = scmp.eq.s32.totalorder %s83, 0
    %s86 = sadd.s32 %s85, 1
    %s87 = scalar_select %p84, %s85, %s86
    %p90 = pneg %p84
    %p91 = scmp.eq.s32.totalorder %s9, 1
    %p92 = por %p90, %p91
    %p93 = scmp.ne.s32.totalorder %s85, %s88
    %p94 = scmp.eq.s32.totalorder %s9, 0
    %p95 = por %p93, %p94
    %p96 = scmp.ne.s32.totalorder %s85, %s88
    %p97 = scmp.eq.s32.totalorder %s14, 1
    %p98 = por %p96, %p97
    %p99 = scmp.ne.s32.totalorder %s88, %s89
    %p100 = scmp.eq.s32.totalorder %s14, 0
    %p101 = por %p99, %p100
    %p102 = scmp.ne.s32.totalorder %s88, %s89
    %p103 = scmp.eq.s32.totalorder %s15, 1
    %p104 = por %p102, %p103
    %p106 = scmp.ne.s32.totalorder %s89, %s105
    %p107 = scmp.eq.s32.totalorder %s15, 0
    %p108 = por %p106, %p107
    %s109 = ssub.s32 %s16, %s28
    %s110 = ssub.s32 %s17, %s24
    %s111 = sor.u32 %s109, %s110
    %p112 = scmp.eq.s32.totalorder %s111, 0
    %s114 = sadd.s32 %s113, 1
    %s115 = scalar_select %p112, %s113, %s114
    %p118 = pneg %p112
    %p119 = scmp.eq.s32.totalorder %s9, 1
    %p120 = por %p118, %p119
    %p121 = scmp.ne.s32.totalorder %s113, %s116
    %p122 = scmp.eq.s32.totalorder %s9, 0
    %p123 = por %p121, %p122
    %p124 = scmp.ne.s32.totalorder %s113, %s116
    %p125 = scmp.eq.s32.totalorder %s14, 1
    %p126 = por %p124, %p125
    %p127 = scmp.ne.s32.totalorder %s116, %s117
    %p128 = scmp.eq.s32.totalorder %s14, 0
    %p129 = por %p127, %p128
    %p130 = scmp.ne.s32.totalorder %s116, %s117
    %p131 = scmp.eq.s32.totalorder %s15, 1
    %p132 = por %p130, %p131
    %p134 = scmp.ne.s32.totalorder %s117, %s133
    %p135 = scmp.eq.s32.totalorder %s15, 0
    %p136 = por %p134, %p135
    %p137 = scmp.le.s32.totalorder 1, %s9
    %p138 = scmp.lt.s32.totalorder %s9, 3
    %p139 = pnand %p137, %p138
    %p140 = pneg %p139
    // Predicated region
    $region9: #{linear_conv_forward.1} parent=5 // pred_check
      _
    $region10: #{linear_conv_forward.1} parent=5 // pred_check_branch
      %142 = sbr.rel (%p139) target = $region12
    $region11: #{linear_conv_forward.1} parent=5 // pred_region
      %s143 = ssub.s32 %s9, 1
      // Predicated region
      $region13: #{linear_conv_forward.1} parent=11 // pred_check
        %p144 = pneg %p75
      $region14: #{linear_conv_forward.1} parent=11 // pred_check_branch
        %146 = sbr.rel (%p144) target = $region16
      $region15: #{linear_conv_forward.1} parent=11 // pred_region
        %p147 = scmp.lt.s32.totalorder %s19, 0
        %s148 = scalar_select %p147, %s19, 0
        %s149 = smul.addr %s148, 4
        %s150 = scalar_lea.vmem %s1, %s149
      $region16: #{linear_conv_forward.1} parent=11 // pred_fallthru
        _
      // Predicated region
      $region17: #{linear_conv_forward.1} parent=11 // pred_check
        %p151 = pneg %p101
      $region18: #{linear_conv_forward.1} parent=11 // pred_check_branch
        %153 = sbr.rel (%p151) target = $region20
      $region19: #{linear_conv_forward.1} parent=11 // pred_region
        %p154 = scmp.lt.s32.totalorder %s19, 0
        %s155 = scalar_select %p154, %s19, 0
        %s156 = smul.addr %s155, 8
        %s157 = scalar_lea.vmem %s2, %s156
      $region20: #{linear_conv_forward.1} parent=11 // pred_fallthru
        _
    $region12: #{linear_conv_forward.1} parent=5 // pred_fallthru
      _
    %p158 = scmp.lt.s32.totalorder %s9, 2
    // Predicated region
    $region21: #{linear_conv_forward.1} parent=5 // pred_check
      %p159 = pneg %p158
    $region22: #{linear_conv_forward.1} parent=5 // pred_check_branch
      %161 = sbr.rel (%p159) target = $region24
    $region23: #{linear_conv_forward.1} parent=5 // pred_region
      // Predicated region
      $region25: #{linear_conv_forward.1} parent=23 // pred_check
        %p162 = pneg %p43
      $region26: #{linear_conv_forward.1} parent=23 // pred_check_branch
        %164 = sbr.rel (%p162) target = $region28
      $region27: #{linear_conv_forward.1} parent=23 // pred_region
        %p165 = scmp.lt.s32.totalorder %s16, 1
        %s166 = scalar_select %p165, %s16, 1
        %p167 = scmp.lt.s32.totalorder %s17, 0
        %s168 = scalar_select %p167, %s17, 0
        %s169 = smul.addr %s168, 4
        %s170 = smul.addr %s166, 4
        %s171 = sadd.s32 %s169, %s170
        %s172 = smul.addr %s171, 2
        %s173 = scalar_lea.vmem %s0, %s172
      $region28: #{linear_conv_forward.1} parent=23 // pred_fallthru
        _
    $region24: #{linear_conv_forward.1} parent=5 // pred_fallthru
      _
    %p174 = scmp.le.s32.totalorder 1, %s9
    %p175 = scmp.lt.s32.totalorder %s9, 3
    %p176 = pnand %p174, %p175
    %p177 = pneg %p176
    // Predicated region
    $region29: #{linear_conv_forward.1} parent=5 // pred_check
      _
    $region30: #{linear_conv_forward.1} parent=5 // pred_check_branch
      %179 = sbr.rel (%p176) target = $region32
    $region31: #{linear_conv_forward.1} parent=5 // pred_region
      %s180 = ssub.s32 %s9, 1
      %p181 = scmp.lt.s32.totalorder %s18, 1
      %s182 = scalar_select %p181, %s18, 1
      %p183 = scmp.lt.s32.totalorder %s19, 0
      %s184 = scalar_select %p183, %s19, 0
      %s185 = smul.addr %s184, 4
      %s186 = smul.addr %s182, 4
      %s187 = sadd.s32 %s185, %s186
      %s188 = smul.addr %s187, 2
      %s189 = scalar_lea.vmem %s0, %s188
      %p190 = pneg %p49
      %p191 = pneg %p46
      %p192 = scmp.lt.s32.totalorder %s19, 0
      %s193 = scalar_select %p192, %s19, 0
      %s194 = smul.addr %s193, 4
      %s195 = scalar_lea.vmem %s1, %s194
      %p196 = pneg %p75
      %p197 = pneg %p72
      %p198 = scmp.lt.s32.totalorder %s19, 0
      %s199 = scalar_select %p198, %s19, 0
      %s200 = smul.addr %s199, 8
      %s201 = scalar_lea.vmem %s2, %s200
      %p202 = pneg %p101
      %p203 = pneg %p98
      %p204 = pneg %p129
      %p205 = pneg %p126
      %p206 = scmp.lt.s32.totalorder %s18, 1
      %s207 = scalar_select %p206, %s18, 1
      %p208 = scmp.lt.s32.totalorder %s19, 0
      %s209 = scalar_select %p208, %s19, 0
      %s210 = smul.addr %s209, 3
      %s211 = smul.addr %s207, 3
      %s212 = sadd.s32 %s210, %s211
      %s213 = smul.addr %s212, 8
      %s214 = scalar_lea.vmem %s3, %s213
      %p215 = scmp.lt.s32.totalorder %s18, 1
      %s216 = scalar_select %p215, %s18, 1
      %p217 = scmp.lt.s32.totalorder %s19, 0
      %s218 = scalar_select %p217, %s19, 0
      %s219 = smul.addr %s218, 4
      %s220 = smul.addr %s216, 4
      %s221 = sadd.s32 %s219, %s220
      %s222 = smul.addr %s221, 2
      %s223 = scalar_lea.vmem %s0, %s222
      %p224 = scmp.lt.s32.totalorder %s19, 0
      %s225 = scalar_select %p224, %s19, 0
      %s226 = smul.addr %s225, 4
      %s227 = scalar_lea.vmem %s1, %s226
      %p228 = scmp.lt.s32.totalorder %s19, 0
      %s229 = scalar_select %p228, %s19, 0
      %s230 = smul.addr %s229, 8
      %s231 = scalar_lea.vmem %s2, %s230
      %p232 = scmp.lt.s32.totalorder %s18, 1
      %s233 = scalar_select %p232, %s18, 1
      %p234 = scmp.lt.s32.totalorder %s19, 0
      %s235 = scalar_select %p234, %s19, 0
      %s236 = smul.addr %s235, 3
      %s237 = smul.addr %s233, 3
      %s238 = sadd.s32 %s236, %s237
      %s239 = smul.addr %s238, 8
      %s240 = scalar_lea.vmem %s3, %s239
      %v242 = vld [vmem:[%s223] sm:$0xff]
      %v244 = vcombine.high %v242, %v242
      %v246 = vunpack.c.l.s4 1983009808
      %v247 = vunpack.c.0.s8 %v246
      %v248 = vlaneseq
      %v249 = vshrl.u32 %v248, 7
      %v250 = vsub.s32 %v247, %v249
      %v251 = vrot.slane %v242, %v250
      %v253 = vunpack.c.l.s4 1983009808
      %v254 = vunpack.c.0.s8 %v253
      %v255 = vlaneseq
      %v256 = vshrl.u32 %v255, 7
      %v257 = vsub.s32 %v254, %v256
      %v258 = vrot.slane %v244, %v257
      %261 = vst [vmem:[#allocation2] sm:$0x33] %v251
      %262 = vst [vmem:[#allocation2 + $0x8] sm:$0x3] %v258
      %v263 = vcombine.low %v242, %v242
      %v265 = vunpack.c.l.s4 1983009808
      %v266 = vunpack.c.0.s8 %v265
      %v267 = vlaneseq
      %v268 = vshrl.u32 %v267, 7
      %v269 = vsub.s32 %v266, %v268
      %v270 = vrot.slane %v263, %v269
      %271 = vrot.lane.b32.xlu0 %v270, 127
      %v272 = vpop.permute.xlu0 %271
      %273 = vrot.lane.b32.xlu0 %v251, 127
      %v274 = vpop.permute.xlu0 %273
      %v275 = vrot.slane %v272, 4
      %v276 = vrot.slane %v274, 4
      %vm277 = vcmask 1043456
      %v278 = vsel %vm277, %v275, %v276
      %vm279 = vcmask 1039360
      %v280 = vsel %vm279, %v272, %v278
      %v281 = vsel %vm279, %v274, %v276
      %284 = vst [vmem:[#allocation2] sm:$0xcc] %v280
      %285 = vst [vmem:[#allocation2 + $0x8] sm:$0xc] %v281
      %286 = vrot.lane.b32.xlu0 %v251, 126
      %v287 = vpop.permute.xlu0 %286
      %288 = vrot.lane.b32.xlu0 %v258, 126
      %v289 = vpop.permute.xlu0 %288
      %v290 = vrot.slane %v287, 4
      %v291 = vrot.slane %v289, 4
      %v292 = vsel %vm277, %v290, %v291
      %vm293 = vcmask 1031168
      %v294 = vsel %vm293, %v287, %v292
      %v295 = vsel %vm293, %v289, %v291
      %298 = vst [vmem:[#allocation2 + $0xc] sm:$0x33] %v294
      %299 = vst [vmem:[#allocation2 + $0x14] sm:$0x3] %v295
      %300 = vrot.lane.b32.xlu0 %v270, 110
      %v301 = vpop.permute.xlu0 %300
      %302 = vrot.lane.b32.xlu0 %v251, 110
      %v303 = vpop.permute.xlu0 %302
      %v304 = vrot.slane %v301, 4
      %v305 = vrot.slane %v303, 4
      %v306 = vsel %vm277, %v304, %v305
      %vm307 = vcmask 900096
      %v308 = vsel %vm307, %v301, %v306
      %v309 = vsel %vm307, %v303, %v305
      %312 = vst [vmem:[#allocation2 + $0xc] sm:$0xcc] %v308
      %313 = vst [vmem:[#allocation2 + $0x14] sm:$0xc] %v309
      %314 = vrot.lane.b32.xlu0 %v251, 109
      %v315 = vpop.permute.xlu0 %314
      %316 = vrot.lane.b32.xlu0 %v258, 109
      %v317 = vpop.permute.xlu0 %316
      %v318 = vrot.slane %v315, 4
      %v319 = vrot.slane %v317, 4
      %v320 = vsel %vm277, %v318, %v319
      %vm321 = vcmask 891904
      %v322 = vsel %vm321, %v315, %v320
      %v323 = vsel %vm321, %v317, %v319
      %326 = vst [vmem:[#allocation2 + $0x18] sm:$0x33] %v322
      %327 = vst [vmem:[#allocation2 + $0x20] sm:$0x3] %v323
      %328 = vrot.lane.b32.xlu0 %v270, 108
      %v329 = vpop.permute.xlu0 %328
      %330 = vrot.lane.b32.xlu0 %v251, 108
      %v331 = vpop.permute.xlu0 %330
      %v332 = vrot.slane %v329, 4
      %v333 = vrot.slane %v331, 4
      %v334 = vsel %vm277, %v332, %v333
      %vm335 = vcmask 883712
      %v336 = vsel %vm335, %v329, %v334
      %v337 = vsel %vm335, %v331, %v333
      %340 = vst [vmem:[#allocation2 + $0x18] sm:$0xcc] %v336
      %341 = vst [vmem:[#allocation2 + $0x20] sm:$0xc] %v337
      %342 = vrot.lane.b32.xlu0 %v251, 92
      %v343 = vpop.permute.xlu0 %342
      %344 = vrot.lane.b32.xlu0 %v258, 92
      %v345 = vpop.permute.xlu0 %344
      %v346 = vrot.slane %v343, 4
      %v347 = vrot.slane %v345, 4
      %v348 = vsel %vm277, %v346, %v347
      %vm349 = vcmask 752640
      %v350 = vsel %vm349, %v343, %v348
      %v351 = vsel %vm349, %v345, %v347
      %354 = vst [vmem:[#allocation2 + $0x24] sm:$0x33] %v350
      %355 = vst [vmem:[#allocation2 + $0x2c] sm:$0x3] %v351
      %356 = vrot.lane.b32.xlu0 %v270, 91
      %v357 = vpop.permute.xlu0 %356
      %358 = vrot.lane.b32.xlu0 %v251, 91
      %v359 = vpop.permute.xlu0 %358
      %v360 = vrot.slane %v357, 4
      %v361 = vrot.slane %v359, 4
      %v362 = vsel %vm277, %v360, %v361
      %vm363 = vcmask 744448
      %v364 = vsel %vm363, %v357, %v362
      %v365 = vsel %vm363, %v359, %v361
      %368 = vst [vmem:[#allocation2 + $0x24] sm:$0xcc] %v364
      %369 = vst [vmem:[#allocation2 + $0x2c] sm:$0xc] %v365
      %370 = vrot.lane.b32.xlu0 %v251, 90
      %v371 = vpop.permute.xlu0 %370
      %372 = vrot.lane.b32.xlu0 %v258, 90
      %v373 = vpop.permute.xlu0 %372
      %v374 = vrot.slane %v371, 4
      %v375 = vrot.slane %v373, 4
      %v376 = vsel %vm277, %v374, %v375
      %vm377 = vcmask 736256
      %v378 = vsel %vm377, %v371, %v376
      %v379 = vsel %vm377, %v373, %v375
      %382 = vst [vmem:[#allocation2 + $0x30] sm:$0x33] %v378
      %383 = vst [vmem:[#allocation2 + $0x38] sm:$0x3] %v379
      %v384 = vld [vmem:[%s227] sm:$0xf]
      %v385 = vld [vmem:[#allocation2] sm:$0xff]
      %v386 = vld [vmem:[#allocation2 + $0x8] sm:$0xf]
      %v387 = vld [vmem:[#allocation2 + $0xc] sm:$0xff]
      %v388 = vld [vmem:[#allocation2 + $0x14] sm:$0xf]
      %v389 = vld [vmem:[#allocation2 + $0x18] sm:$0xff]
      %v390 = vld [vmem:[#allocation2 + $0x20] sm:$0xf]
      %v391 = vld [vmem:[#allocation2 + $0x24] sm:$0xff]
      %v392 = vld [vmem:[#allocation2 + $0x2c] sm:$0xf]
      %v393 = vld [vmem:[#allocation2 + $0x30] sm:$0x33]
      %v394 = vld [vmem:[#allocation2 + $0x38] sm:$0x3]
      %v395 = vld [vmem:[%s231] sm:$0xff]
      %397 = vset.pattern.permute.xlu0 0
      %398 = vperm.xlu0 %397, %v395
      %v399 = vpop.permute.xlu0 %398
      %v411 = vunpack.c.l.b16 %v385
      %v412 = vunpack.c.h.b16 %v385
      %v413 = vunpack.c.l.b16 %v386
      %v414 = vunpack.c.l.b16 %v387
      %v415 = vunpack.c.h.b16 %v387
      %v416 = vunpack.c.l.b16 %v388
      %v417 = vunpack.c.l.b16 %v389
      %v418 = vunpack.c.h.b16 %v389
      %v419 = vunpack.c.l.b16 %v390
      %v420 = vunpack.c.l.b16 %v391
      %v421 = vunpack.c.h.b16 %v391
      %v422 = vunpack.c.l.b16 %v392
      %v423 = vunpack.c.l.b16 %v393
      %v424 = vunpack.c.h.b16 %v393
      %v425 = vunpack.c.l.b16 %v394
      %v426 = vpack.c.b16 %v414, %v411
      %v427 = vpack.c.b16 %v415, %v412
      %v428 = vpack.c.b16 %v416, %v413
      %v429 = vpack.c.b16 %v420, %v417
      %v430 = vpack.c.b16 %v421, %v418
      %v431 = vpack.c.b16 %v422, %v419
      %v432 = vpack.c.b16 %v423, %v423
      %v433 = vpack.c.b16 %v424, %v424
      %v434 = vpack.c.b16 %v425, %v425
      %vm441 = vcmask 293888
      %v443 = vsel %vm441, %v384, 0
      %vm445 = vcmask 1041408
      %v447 = vsel %vm445, %v432, 0
      %v450 = vsel %vm445, %v433, 0
      %v453 = vsel %vm445, %v434, 0
      %455 = vmatprep.subr.bf16.mxu0 0
      %456 = vmatpush1.bf16.msra.mxu0 0
      %457 = vmatprep.subr.bf16.mxu0 0
      %458 = vmatpush1.bf16.msra.mxu0 0
      %459 = vmatprep.subr.bf16.mxu0 0
      %460 = vmatpush1.bf16.msra.mxu0 0
      %461 = vmatprep.subr.bf16.mxu0 0
      %462 = vmatpush1.bf16.msra.mxu0 0
      %463 = vmatprep.subr.bf16.mxu0 0
      %464 = vmatpush1.bf16.msra.mxu0 0
      %465 = vmatprep.subr.bf16.mxu0 %v450
      %466 = vmatpush1.bf16.msra.mxu0 %v447
      %467 = vmatprep.subr.bf16.mxu0 %v430
      %468 = vmatpush1.bf16.msra.mxu0 %v429
      %469 = vmatprep.subr.bf16.mxu0 %v427
      %470 = vmatpush1.bf16.msra.mxu0 %v426
      %471 = vmatprep.subr.bf16.mxu0 0
      %472 = vmatpush2.bf16.msra.mxu0 0
      %473 = vmatprep.subr.bf16.mxu0 0
      %474 = vmatpush2.bf16.msra.mxu0 0
      %475 = vmatprep.subr.bf16.mxu0 0
      %476 = vmatpush2.bf16.msra.mxu0 0
      %477 = vmatprep.subr.bf16.mxu0 0
      %478 = vmatpush2.bf16.msra.mxu0 0
      %479 = vmatprep.subr.bf16.mxu0 0
      %480 = vmatpush2.bf16.msra.mxu0 0
      %481 = vmatprep.subr.bf16.mxu0 0
      %482 = vmatpush2.bf16.msra.mxu0 0
      %483 = vmatprep.subr.bf16.mxu0 0
      %484 = vmatpush2.bf16.msra.mxu0 0
      %485 = vmatprep.subr.bf16.mxu0 0
      %486 = vmatpush2.bf16.msra.mxu0 0
      %487 = vmatprep.mubr.bf16.mxu0 0
      %488 = vmatmul.mubr.bf16.gmra.mxu0 %v443
      %v489 = vpop.f32.mrf.mxu0
      %v490 = vadd.f32 %v399, %v489
      %v491 = vpop.f32.mrf.mxu0
      %v492 = vadd.f32 %v399, %v491
      %v493 = vpop.f32.mrf.mxu0
      %v494 = vpop.f32.mrf.mxu0
      %495 = vdwg.mxu0
      %496 = vmatprep.subr.bf16.mxu0 0
      %497 = vmatpush1.bf16.msra.mxu0 0
      %498 = vmatprep.subr.bf16.mxu0 0
      %499 = vmatpush1.bf16.msra.mxu0 0
      %500 = vmatprep.subr.bf16.mxu0 0
      %501 = vmatpush1.bf16.msra.mxu0 0
      %502 = vmatprep.subr.bf16.mxu0 0
      %503 = vmatpush1.bf16.msra.mxu0 0
      %504 = vmatprep.subr.bf16.mxu0 0
      %505 = vmatpush1.bf16.msra.mxu0 0
      %506 = vmatprep.subr.bf16.mxu0 0
      %507 = vmatpush1.bf16.msra.mxu0 %v453
      %508 = vmatprep.subr.bf16.mxu0 0
      %509 = vmatpush1.bf16.msra.mxu0 %v431
      %510 = vmatprep.subr.bf16.mxu0 0
      %511 = vmatpush1.bf16.msra.mxu0 %v428
      %512 = vmatprep.subr.bf16.mxu0 0
      %513 = vmatpush2.bf16.msra.mxu0 0
      %514 = vmatprep.subr.bf16.mxu0 0
      %515 = vmatpush2.bf16.msra.mxu0 0
      %516 = vmatprep.subr.bf16.mxu0 0
      %517 = vmatpush2.bf16.msra.mxu0 0
      %518 = vmatprep.subr.bf16.mxu0 0
      %519 = vmatpush2.bf16.msra.mxu0 0
      %520 = vmatprep.subr.bf16.mxu0 0
      %521 = vmatpush2.bf16.msra.mxu0 0
      %522 = vmatprep.subr.bf16.mxu0 0
      %523 = vmatpush2.bf16.msra.mxu0 0
      %524 = vmatprep.subr.bf16.mxu0 0
      %525 = vmatpush2.bf16.msra.mxu0 0
      %526 = vmatprep.subr.bf16.mxu0 0
      %527 = vmatpush2.bf16.msra.mxu0 0
      %528 = vmatprep.mubr.bf16.mxu0 0
      %529 = vmatmul.mubr.bf16.gmra.mxu0 %v443
      %v530 = vpop.f32.mrf.mxu0
      %v531 = vadd.f32 %v399, %v530
      %v532 = vpop.f32.mrf.mxu0
      %v533 = vpop.f32.mrf.mxu0
      %v534 = vpop.f32.mrf.mxu0
      %535 = vdwg.mxu0
      %536 = vst [vmem:[%s240] sm:$0xff] %v490
      %537 = vst [vmem:[%s240 + $0x8] sm:$0xff] %v492
      %538 = vst [vmem:[%s240 + $0x10] sm:$0xff] %v531
      %p539 = scmp.lt.s32.totalorder %s18, 1
      %s540 = scalar_select %p539, %s18, 1
      %p541 = scmp.lt.s32.totalorder %s19, 0
      %s542 = scalar_select %p541, %s19, 0
      %s543 = smul.addr %s542, 3
      %s544 = smul.addr %s540, 3
      %s545 = sadd.s32 %s543, %s544
      %s546 = smul.addr %s545, 8
      %s547 = scalar_lea.vmem %s3, %s546
      // Predicated region
      $region33: #{linear_conv_forward.1} parent=31 // pred_check
        %p548 = pneg %p126
      $region34: #{linear_conv_forward.1} parent=31 // pred_check_branch
        %550 = sbr.rel (%p548) target = $region36
      $region35: #{linear_conv_forward.1} parent=31 // pred_region
        _
      $region36: #{linear_conv_forward.1} parent=31 // pred_fallthru
        _
    $region32: #{linear_conv_forward.1} parent=5 // pred_fallthru
      _
    %p551 = scmp.le.s32.totalorder 2, %s9
    // Predicated region
    $region37: #{linear_conv_forward.1} parent=5 // pred_check
      %p552 = pneg %p551
    $region38: #{linear_conv_forward.1} parent=5 // pred_check_branch
      %554 = sbr.rel (%p552) target = $region40
    $region39: #{linear_conv_forward.1} parent=5 // pred_region
      %s555 = ssub.s32 %s9, 2
      // Predicated region
      $region41: #{linear_conv_forward.1} parent=39 // pred_check
        %p556 = pneg %p132
      $region42: #{linear_conv_forward.1} parent=39 // pred_check_branch
        %558 = sbr.rel (%p556) target = $region44
      $region43: #{linear_conv_forward.1} parent=39 // pred_region
        %p559 = scmp.lt.s32.totalorder %s20, 1
        %s560 = scalar_select %p559, %s20, 1
        %p561 = scmp.lt.s32.totalorder %s21, 0
        %s562 = scalar_select %p561, %s21, 0
        %s563 = smul.addr %s562, 3
        %s564 = smul.addr %s560, 3
        %s565 = sadd.s32 %s563, %s564
        %s566 = smul.addr %s565, 8
        %s567 = scalar_lea.vmem %s3, %s566
      $region44: #{linear_conv_forward.1} parent=39 // pred_fallthru
        _
    $region40: #{linear_conv_forward.1} parent=5 // pred_fallthru
      _
  $region6: #{linear_conv_forward.1} parent=0 // loop_footer
    %s13 = sadd.s32 1, %s9
  $region7: #{linear_conv_forward.1} parent=0 // loop_footer_branch
    %8 = sbr.rel target = $region3
  $region8: #{linear_conv_forward.1} parent=0 // loop_exit
    _

</llo_original>
